<compile_context>
chip_gen: v5e
topology: v5e:2x2
jax: 0.10.0
libtpu: 0.0.40
codegen_flags: <defaults>
</compile_context>

<pallas_src>
import jax
import jax.numpy as jnp
from jax.experimental import pallas as pl
from jax.experimental.pallas import tpu as pltpu


def self_output_kernel(h_ref, res_ref, wt_ref, b_ref, g_ref, be_ref, o_ref):
    # Dense: cast activations to the weight's (MXU) dtype in-kernel — no extra
    # HBM pass in the wrapper.  Weight arrives pre-transposed to (in, out), so
    # this is the canonical A @ B contraction with f32 accumulation.
    y = jnp.dot(h_ref[...].astype(wt_ref.dtype), wt_ref[...],
                preferred_element_type=jnp.float32)
    y = y + b_ref[...].astype(jnp.float32)            # bias broadcast over rows

    # TODO(synk): training-mode dropout omitted (eval/inference identity).
    z = y + res_ref[...].astype(jnp.float32)          # residual add in f32

    # TF-style LayerNorm over the hidden (last) axis, eps inside the sqrt.
    # Two-pass (center first) for numerical robustness; reductions use XLU
    # slots that have slack while the kernel is DMA/MXU bound.
    inv_h = jnp.float32(1.0 / z.shape[-1])
    mean = jnp.sum(z, axis=-1, keepdims=True) * inv_h
    zc = z - mean
    var = jnp.sum(zc * zc, axis=-1, keepdims=True) * inv_h
    inv_std = jax.lax.rsqrt(var + jnp.float32(1e-12))  # EUP rsqrt + cheap VPU mul
    out = zc * inv_std
    out = out * g_ref[...].astype(jnp.float32) + be_ref[...].astype(jnp.float32)
    o_ref[...] = out.astype(o_ref.dtype)


def prepare_dense_weight(weight, mm_dtype=jnp.bfloat16):
    """One-time prep (do this at model init and cache the result):
    PyTorch (out, in) layout -> (in, out) layout, cast to the MXU dtype."""
    return weight.T.astype(mm_dtype)


def bert_self_output(hidden_states, input_tensor, weight, bias, gamma, beta,
                     *, tm=512, mm_dtype=jnp.bfloat16, out_dtype=None,
                     vmem_limit_bytes=48 * 1024 * 1024, prepared_weight=None):
    """hidden_states, input_tensor: [B, S, H] (f32 or bf16);
    weight: [H, H] in PyTorch (out, in) layout (or pass prepared_weight)."""
    B, S, H = hidden_states.shape
    M = B * S
    if out_dtype is None:
        out_dtype = hidden_states.dtype

    # Row tile: clamp for small inputs; keep a multiple of 256 when possible so
    # MXU passes stay full, stores stay lane-dense, and v7x's two TCs get equal,
    # aligned shards.  The grid is ragged — no jnp.pad copies of the activations.
    tile = max(8, min(tm, pl.cdiv(M, 8) * 8))
    if tile >= 256:
        tile -= tile % 256
    grid_m = pl.cdiv(M, tile)

    # Reshapes of contiguous arrays are metadata-only (no HBM copy).
    h2 = hidden_states.reshape(M, H)
    r2 = input_tensor.reshape(M, H)

    # Weight: pre-transposed (in, out) + cast, paid once per call here; cache it
    # at model init via prepare_dense_weight() to make it free.
    w_t = prepare_dense_weight(weight, mm_dtype) if prepared_weight is None else prepared_weight
    b2 = bias.reshape(1, H)
    g2 = gamma.reshape(1, H)
    be2 = beta.reshape(1, H)

    cost = pl.CostEstimate(
        flops=2 * M * H * H,
        transcendentals=M,                                   # one rsqrt per row
        bytes_accessed=(M * H * hidden_states.dtype.itemsize  # activations (as-is)
                        + M * H * input_tensor.dtype.itemsize  # residual
                        + H * H * jnp.dtype(mm_dtype).itemsize  # weight (once)
                        + M * H * jnp.dtype(out_dtype).itemsize))  # output

    out = pl.pallas_call(
        self_output_kernel,
        out_shape=jax.ShapeDtypeStruct((M, H), out_dtype),
        grid_spec=pltpu.PrefetchScalarGridSpec(
            num_scalar_prefetch=0,
            grid=(grid_m,),
            in_specs=[
                pl.BlockSpec((tile, H), lambda i: (i, 0)),  # hidden rows tile
                pl.BlockSpec((tile, H), lambda i: (i, 0)),  # residual rows tile
                pl.BlockSpec((H, H), lambda i: (0, 0)),     # dense weight (resident)
                pl.BlockSpec((1, H), lambda i: (0, 0)),     # dense bias
                pl.BlockSpec((1, H), lambda i: (0, 0)),     # LN gamma
                pl.BlockSpec((1, H), lambda i: (0, 0)),     # LN beta
            ],
            out_specs=pl.BlockSpec((tile, H), lambda i: (i, 0)),
        ),
        compiler_params=pltpu.CompilerParams(
            dimension_semantics=("parallel",),              # rows independent
            vmem_limit_bytes=vmem_limit_bytes),
        cost_estimate=cost,
    )(h2, r2, w_t, b2, g2, be2)

    return out.reshape(B, S, H)


def reference(hidden_states, input_tensor, weight, bias, gamma, beta):
    y = jnp.einsum("bsh,oh->bso", hidden_states, weight) + bias
    z = y + input_tensor
    u = jnp.mean(z, axis=-1, keepdims=True)
    s = jnp.mean((z - u) ** 2, axis=-1, keepdims=True)
    x = (z - u) / jnp.sqrt(s + 1e-12)
    return gamma * x + beta


if __name__ == "__main__":
    B, S, H = 2, 8, 32
    key = jax.random.PRNGKey(0)
    k1, k2, k3, k4 = jax.random.split(key, 4)

    hidden_states = jax.random.normal(k1, (B, S, H), dtype=jnp.float32)
    input_tensor = jax.random.normal(k2, (B, S, H), dtype=jnp.float32)

    # Deterministic parameter init (nn.Linear-like weights, LN gamma=1, beta=0).
    weight = 0.02 * jax.random.normal(k3, (H, H), dtype=jnp.float32)  # (out, in)
    bias = 0.01 * jax.random.normal(k4, (H,), dtype=jnp.float32)
    gamma = jnp.ones((H,), dtype=jnp.float32)
    beta = jnp.zeros((H,), dtype=jnp.float32)

    out = bert_self_output(hidden_states, input_tensor, weight, bias, gamma, beta)
    out = jax.block_until_ready(out)

    ref = reference(hidden_states, input_tensor, weight, bias, gamma, beta)
    assert out.shape == (B, S, H)
    # bf16 matmul operands -> compare against the full-f32 reference with a
    # tolerance that covers bf16 rounding.
    assert jnp.allclose(out, ref, atol=2e-2, rtol=2e-2), "mismatch vs reference"
    print("KERNEL_OK")
</pallas_src>

<mosaic_0001>
module attributes {stable_mosaic.version = 11 : i64} {
  func.func @self_output_kernel(%arg0: i32, %arg1: memref<16x32xf32, #tpu.memory_space<vmem>>, %arg2: memref<16x32xf32, #tpu.memory_space<vmem>>, %arg3: memref<32x32xbf16, #tpu.memory_space<vmem>>, %arg4: memref<1x32xf32, #tpu.memory_space<vmem>>, %arg5: memref<1x32xf32, #tpu.memory_space<vmem>>, %arg6: memref<1x32xf32, #tpu.memory_space<vmem>>, %arg7: memref<16x32xf32, #tpu.memory_space<vmem>>) attributes {dimension_semantics = [#tpu.dimension_semantics<parallel>], iteration_bounds = array<i64: 1>, scalar_prefetch = 0 : i64, scratch_operands = 0 : i64, tpu.core_type = #tpu.core_type<tc>, window_params = [{transform_indices = @transform_0, window_bounds = array<i64: 16, 32>}, {transform_indices = @transform_1, window_bounds = array<i64: 16, 32>}, {pipeline_mode = #tpu.pipeline_mode<synchronous>, transform_indices = @transform_2, window_bounds = array<i64: 32, 32>}, {pipeline_mode = #tpu.pipeline_mode<synchronous>, transform_indices = @transform_3, window_bounds = array<i64: 1, 32>}, {pipeline_mode = #tpu.pipeline_mode<synchronous>, transform_indices = @transform_4, window_bounds = array<i64: 1, 32>}, {pipeline_mode = #tpu.pipeline_mode<synchronous>, transform_indices = @transform_5, window_bounds = array<i64: 1, 32>}, {transform_indices = @transform_6, window_bounds = array<i64: 16, 32>}]} {
    %c0 = arith.constant 0 : index
    %c0_0 = arith.constant 0 : index
    %0 = vector.load %arg1[%c0, %c0_0] : memref<16x32xf32, #tpu.memory_space<vmem>>, vector<16x32xf32>
    %1 = arith.truncf %0 : vector<16x32xf32> to vector<16x32xbf16>
    %c0_1 = arith.constant 0 : index
    %c0_2 = arith.constant 0 : index
    %2 = vector.load %arg3[%c0_1, %c0_2] : memref<32x32xbf16, #tpu.memory_space<vmem>>, vector<32x32xbf16>
    %cst = arith.constant dense<0.000000e+00> : vector<16x32xf32>
    %3 = tpu.matmul %1, %2, %cst {dimension_numbers = #tpu.dot_dimension_numbers<[1], [0], [0], [1], [0, 0, 1, 1], [], []>} : vector<16x32xbf16>, vector<32x32xbf16>, vector<16x32xf32> -> vector<16x32xf32>
    %c0_3 = arith.constant 0 : index
    %c0_4 = arith.constant 0 : index
    %4 = vector.load %arg4[%c0_3, %c0_4] : memref<1x32xf32, #tpu.memory_space<vmem>>, vector<1x32xf32>
    %5 = vector.broadcast %4 : vector<1x32xf32> to vector<16x32xf32>
    %6 = arith.addf %3, %5 : vector<16x32xf32>
    %c0_5 = arith.constant 0 : index
    %c0_6 = arith.constant 0 : index
    %7 = vector.load %arg2[%c0_5, %c0_6] : memref<16x32xf32, #tpu.memory_space<vmem>>, vector<16x32xf32>
    %8 = arith.addf %6, %7 : vector<16x32xf32>
    %cst_7 = arith.constant dense<0.000000e+00> : vector<16xf32>
    %9 = vector.multi_reduction <add>, %8, %cst_7 [1] : vector<16x32xf32> to vector<16xf32>
    %10 = vector.shape_cast %9 : vector<16xf32> to vector<16x1xf32>
    %cst_8 = arith.constant 3.125000e-02 : f32
    %11 = vector.broadcast %cst_8 : f32 to vector<16x1xf32>
    %12 = arith.mulf %10, %11 : vector<16x1xf32>
    %13 = vector.broadcast %12 : vector<16x1xf32> to vector<16x32xf32>
    %14 = arith.subf %8, %13 : vector<16x32xf32>
    %15 = arith.mulf %14, %14 : vector<16x32xf32>
    %cst_9 = arith.constant dense<0.000000e+00> : vector<16xf32>
    %16 = vector.multi_reduction <add>, %15, %cst_9 [1] : vector<16x32xf32> to vector<16xf32>
    %17 = vector.shape_cast %16 : vector<16xf32> to vector<16x1xf32>
    %cst_10 = arith.constant 3.125000e-02 : f32
    %18 = vector.broadcast %cst_10 : f32 to vector<16x1xf32>
    %19 = arith.mulf %17, %18 : vector<16x1xf32>
    %cst_11 = arith.constant 9.99999996E-13 : f32
    %20 = vector.broadcast %cst_11 : f32 to vector<16x1xf32>
    %21 = arith.addf %19, %20 : vector<16x1xf32>
    %22 = math.rsqrt %21 : vector<16x1xf32>
    %23 = vector.broadcast %22 : vector<16x1xf32> to vector<16x32xf32>
    %24 = arith.mulf %14, %23 : vector<16x32xf32>
    %c0_12 = arith.constant 0 : index
    %c0_13 = arith.constant 0 : index
    %25 = vector.load %arg5[%c0_12, %c0_13] : memref<1x32xf32, #tpu.memory_space<vmem>>, vector<1x32xf32>
    %26 = vector.broadcast %25 : vector<1x32xf32> to vector<16x32xf32>
    %27 = arith.mulf %24, %26 : vector<16x32xf32>
    %c0_14 = arith.constant 0 : index
    %c0_15 = arith.constant 0 : index
    %28 = vector.load %arg6[%c0_14, %c0_15] : memref<1x32xf32, #tpu.memory_space<vmem>>, vector<1x32xf32>
    %29 = vector.broadcast %28 : vector<1x32xf32> to vector<16x32xf32>
    %30 = arith.addf %27, %29 : vector<16x32xf32>
    %c0_16 = arith.constant 0 : index
    %c0_17 = arith.constant 0 : index
    %31 = vector.load %arg7[%c0_16, %c0_17] : memref<16x32xf32, #tpu.memory_space<vmem>>, vector<16x32xf32>
    tpu.vector_store %arg7[%c0_16, %c0_17], %30 {strides = array<i32>} : memref<16x32xf32, #tpu.memory_space<vmem>>, vector<16x32xf32>,
    return
  }
  func.func @transform_0(%arg0: i32) -> (i32, i32) {
    %c0_i32 = arith.constant 0 : i32
    %c0_i32_0 = arith.constant 0 : i32
    return %arg0, %c0_i32 : i32, i32
  }
  func.func @transform_1(%arg0: i32) -> (i32, i32) {
    %c0_i32 = arith.constant 0 : i32
    %c0_i32_0 = arith.constant 0 : i32
    return %arg0, %c0_i32 : i32, i32
  }
  func.func @transform_2(%arg0: i32) -> (i32, i32) {
    %c0_i32 = arith.constant 0 : i32
    %c0_i32_0 = arith.constant 0 : i32
    %c0_i32_1 = arith.constant 0 : i32
    return %c0_i32, %c0_i32_0 : i32, i32
  }
  func.func @transform_3(%arg0: i32) -> (i32, i32) {
    %c0_i32 = arith.constant 0 : i32
    %c0_i32_0 = arith.constant 0 : i32
    %c0_i32_1 = arith.constant 0 : i32
    return %c0_i32, %c0_i32_0 : i32, i32
  }
  func.func @transform_4(%arg0: i32) -> (i32, i32) {
    %c0_i32 = arith.constant 0 : i32
    %c0_i32_0 = arith.constant 0 : i32
    %c0_i32_1 = arith.constant 0 : i32
    return %c0_i32, %c0_i32_0 : i32, i32
  }
  func.func @transform_5(%arg0: i32) -> (i32, i32) {
    %c0_i32 = arith.constant 0 : i32
    %c0_i32_0 = arith.constant 0 : i32
    %c0_i32_1 = arith.constant 0 : i32
    return %c0_i32, %c0_i32_0 : i32, i32
  }
  func.func @transform_6(%arg0: i32) -> (i32, i32) {
    %c0_i32 = arith.constant 0 : i32
    %c0_i32_0 = arith.constant 0 : i32
    return %arg0, %c0_i32 : i32, i32
  }
}

</mosaic_0001>

<llo_original>
// kernel: tpu_custom_call.1
$region0: #{tpu_custom_call.1}
  #allocation0 [shape = 'u32[]', space=smem, size = 0x4, offset = 0x4, fixed_abs, tag = 'smem constant byte address 0x4 - core index']
  #allocation1 [shape = 'u32[72,128]{1,0:T(1,128)}', space=vmem, size = 0x9000, scoped, tag = 'internal scratch']
  %s0 = inlined_call_operand.hbm [shape: f32[16,32], index: 0, kind: input, shape index: {}]
  %s1 = inlined_call_operand.hbm [shape: f32[16,32], index: 1, kind: input, shape index: {}]
  %s2 = inlined_call_operand.hbm [shape: bf16[32,32], index: 2, kind: input, shape index: {}]
  %s3 = inlined_call_operand.vmem [shape: f32[1,32], index: 3, kind: input, shape index: {}]
  %s4 = inlined_call_operand.vmem [shape: f32[1,32], index: 4, kind: input, shape index: {}]
  %s5 = inlined_call_operand.vmem [shape: f32[1,32], index: 5, kind: input, shape index: {}]
  %s6 = inlined_call_operand.hbm [shape: f32[16,32], index: 6, kind: output, shape index: {}]
  %s7 = sld [smem:[#allocation0]]
  $region46: #{tpu_custom_call.1} parent=0
    _
  %s9 = ssub.s32 1, %s7
  %s10 = scalar_select 0, %s9, %s7
  $region1: #{tpu_custom_call.1} parent=0
    #allocation2 [shape = 'u8[8192]{0}', space=vmem, size = 0x2000, scoped, tag = 'input window, operand 0, single buffered']
    #allocation3 [shape = 's32[1]{0}', space=sflag, size = 0x4, scoped, tag = 'scoped memory for tpu_custom_call.1']
    #allocation4 [shape = 's32[1]{0}', space=sflag, size = 0x4, scoped, tag = 'scoped memory for tpu_custom_call.1']
    #allocation5 [shape = 'u8[8192]{0}', space=vmem, size = 0x2000, scoped, tag = 'input window, operand 1, single buffered']
    #allocation6 [shape = 's32[1]{0}', space=sflag, size = 0x4, scoped, tag = 'scoped memory for tpu_custom_call.1']
    #allocation7 [shape = 'u8[8192]{0}', space=vmem, size = 0x2000, scoped, tag = 'input window, operand 2, single buffered']
    #allocation8 [shape = 'u8[8192]{0}', space=vmem, size = 0x2000, scoped, tag = 'output window, operand 0, single buffered']
    %11 = vsyncpa [#allocation3], 0
    %12 = vsyncpa [#allocation6], 0
    %13 = vsyncpa [#allocation4], 0
    // Predicated region
    $region2: #{tpu_custom_call.1} parent=1 // pred_check
      _
    $region3: #{tpu_custom_call.1} parent=1 // pred_check_branch
      %15 = sbr.rel (0) target = $region5
    $region4: #{tpu_custom_call.1} parent=1 // pred_region
      %17 = vsyncadd [#allocation3], 0
      %s18 = sshll.u32 %s0, 4
      %s19 = int_to_ptr.hbm [resolvable:$true] %s18
      %s20 = sshll.u32 [#allocation2], 4
      %s21 = int_to_ptr.vmem [resolvable:$true] %s20
      %26 = dma.hbm_to_vmem [thread:$0]  %s19, 256, %s21, [#allocation3], 128, 128, 8
    $region5: #{tpu_custom_call.1} parent=1 // pred_fallthru
      _
    // Predicated region
    $region6: #{tpu_custom_call.1} parent=1 // pred_check
      _
    $region7: #{tpu_custom_call.1} parent=1 // pred_check_branch
      %28 = sbr.rel (0) target = $region9
    $region8: #{tpu_custom_call.1} parent=1 // pred_region
      %30 = vsyncadd [#allocation6], 0
      %s31 = sshll.u32 %s1, 4
      %s32 = int_to_ptr.hbm [resolvable:$true] %s31
      %s33 = sshll.u32 [#allocation5], 4
      %s34 = int_to_ptr.vmem [resolvable:$true] %s33
      %39 = dma.hbm_to_vmem [thread:$0]  %s32, 256, %s34, [#allocation6], 128, 128, 8
    $region9: #{tpu_custom_call.1} parent=1 // pred_fallthru
      _
    // Predicated region
    $region10: #{tpu_custom_call.1} parent=1 // pred_check
      _
    $region11: #{tpu_custom_call.1} parent=1 // pred_check_branch
      %41 = sbr.rel (0) target = $region13
    $region12: #{tpu_custom_call.1} parent=1 // pred_region
      %43 = vsyncadd [#allocation6], 0
      %s44 = sshll.u32 %s2, 4
      %s45 = int_to_ptr.hbm [resolvable:$true] %s44
      %s46 = sshll.u32 [#allocation7], 4
      %s47 = int_to_ptr.vmem [resolvable:$true] %s46
      %52 = dma.hbm_to_vmem [thread:$0]  %s45, 256, %s47, [#allocation6], 64, 64, 4
    $region13: #{tpu_custom_call.1} parent=1 // pred_fallthru
      _
    // Predicated region
    $region14: #{tpu_custom_call.1} parent=1 // pred_check
      _
    $region15: #{tpu_custom_call.1} parent=1 // pred_check_branch
      %54 = sbr.rel (0) target = $region17
    $region16: #{tpu_custom_call.1} parent=1 // pred_region
      _
    $region17: #{tpu_custom_call.1} parent=1 // pred_fallthru
      _
    // Predicated region
    $region18: #{tpu_custom_call.1} parent=1 // pred_check
      _
    $region19: #{tpu_custom_call.1} parent=1 // pred_check_branch
      %56 = sbr.rel (0) target = $region21
    $region20: #{tpu_custom_call.1} parent=1 // pred_region
      _
    $region21: #{tpu_custom_call.1} parent=1 // pred_fallthru
      _
    // Predicated region
    $region22: #{tpu_custom_call.1} parent=1 // pred_check
      _
    $region23: #{tpu_custom_call.1} parent=1 // pred_check_branch
      %58 = sbr.rel (0) target = $region25
    $region24: #{tpu_custom_call.1} parent=1 // pred_region
      _
    $region25: #{tpu_custom_call.1} parent=1 // pred_fallthru
      _
    // Predicated region
    $region26: #{tpu_custom_call.1} parent=1 // pred_check
      _
    $region27: #{tpu_custom_call.1} parent=1 // pred_check_branch
      %60 = sbr.rel (0) target = $region29
    $region28: #{tpu_custom_call.1} parent=1 // pred_region
      %62 = dma.done [#allocation3], 256
    $region29: #{tpu_custom_call.1} parent=1 // pred_fallthru
      _
    // Predicated region
    $region30: #{tpu_custom_call.1} parent=1 // pred_check
      _
    $region31: #{tpu_custom_call.1} parent=1 // pred_check_branch
      %64 = sbr.rel (0) target = $region33
    $region32: #{tpu_custom_call.1} parent=1 // pred_region
      %66 = dma.done [#allocation6], 256
    $region33: #{tpu_custom_call.1} parent=1 // pred_fallthru
      _
    // Predicated region
    $region34: #{tpu_custom_call.1} parent=1 // pred_check
      _
    $region35: #{tpu_custom_call.1} parent=1 // pred_check_branch
      %68 = sbr.rel (0) target = $region37
    $region36: #{tpu_custom_call.1} parent=1 // pred_region
      %70 = dma.done [#allocation6], 256
    $region37: #{tpu_custom_call.1} parent=1 // pred_fallthru
      _
    %v72 = vld [vmem:[#allocation2] sm:$0xff]
    %v73 = vld [vmem:[#allocation2 + $0x8] sm:$0xff]
    %v74 = vpack.c.bf16 %v73, %v72
    %v75 = vld [vmem:[#allocation7] sm:$0xf]
    %v76 = vld [vmem:[#allocation7 + $0x4] sm:$0xf]
    %v77 = vld [vmem:[#allocation7 + $0x8] sm:$0xf]
    %v78 = vld [vmem:[#allocation7 + $0xc] sm:$0xf]
    %v79 = vld [vmem:[%s3] sm:$0x1]
    %v81 = vperm.slane %v79, 0
    %v87 = vunpack.c.l.b16 %v75
    %v88 = vunpack.c.l.b16 %v76
    %v89 = vunpack.c.l.b16 %v77
    %v90 = vunpack.c.l.b16 %v78
    %v91 = vpack.c.b16 %v88, %v87
    %v92 = vpack.c.b16 %v90, %v89
    %vm95 = vcmask 261120
    %v97 = vsel %vm95, %v74, 0
    %99 = vmatpush.bf16.msra.mxu0 0
    %100 = vmatpush.bf16.msra.mxu0 0
    %101 = vmatpush.bf16.msra.mxu0 0
    %102 = vmatpush.bf16.msra.mxu0 0
    %103 = vmatpush.bf16.msra.mxu0 0
    %104 = vmatpush.bf16.msra.mxu0 0
    %105 = vmatpush.bf16.msra.mxu0 %v92
    %106 = vmatpush.bf16.msra.mxu0 %v91
    %107 = vmatmul.bf16.gmra.mxu0 %v97
    %v108 = vpop.f32.mrf.mxu0
    %v109 = vadd.f32 %v81, %v108
    %v110 = vpop.f32.mrf.mxu0
    %v111 = vadd.f32 %v81, %v110
    %112 = vdwg.mxu0
    %v113 = vld [vmem:[#allocation5] sm:$0xff]
    %v114 = vld [vmem:[#allocation5 + $0x8] sm:$0xff]
    %v115 = vadd.f32 %v109, %v113
    %v116 = vadd.f32 %v111, %v114
    %v117 = vsel %vm95, %v115, 0.0
    %118 = vadd.xlane.f32.xlu0 %v117
    %v119 = vpop.xlane.xlu0 %118
    %v120 = vsel %vm95, %v116, 0.0
    %121 = vadd.xlane.f32.xlu0 %v120
    %v122 = vpop.xlane.xlu0 %121
    %v123 = vmul.f32 %v119, 0.03125
    %v124 = vmul.f32 %v122, 0.03125
    %v125 = vsub.f32 %v115, %v123
    %v126 = vsub.f32 %v116, %v124
    %v127 = vmul.f32 %v125, %v125
    %v128 = vmul.f32 %v126, %v126
    %v129 = vsel %vm95, %v127, 0.0
    %130 = vadd.xlane.f32.xlu0 %v129
    %v131 = vpop.xlane.xlu0 %130
    %v132 = vsel %vm95, %v128, 0.0
    %133 = vadd.xlane.f32.xlu0 %v132
    %v134 = vpop.xlane.xlu0 %133
    %v135 = vmul.f32 %v131, 0.03125
    %v136 = vmul.f32 %v134, 0.03125
    %v137 = vadd.f32 %v135, 1e-12
    %v138 = vadd.f32 %v136, 1e-12
    %v139 = vrsqrt.pop %v137
    %v140 = vmul.f32 %v139, %v137
    %v141 = vmul.f32 %v140, %v139
    %v142 = vmul.f32 0.5, %v141
    %v143 = vsub.f32 1.5, %v142
    %v144 = vmul.f32 %v139, %v143
    %vm145 = vweird.f32 %v137
    %vm146 = vweird.f32 %v139
    %vm147 = vmor %vm145, %vm146
    %v148 = vsel %vm147, %v139, %v144
    %v149 = vrsqrt.pop %v138
    %v150 = vmul.f32 %v149, %v138
    %v151 = vmul.f32 %v150, %v149
    %v152 = vmul.f32 0.5, %v151
    %v153 = vsub.f32 1.5, %v152
    %v154 = vmul.f32 %v149, %v153
    %vm155 = vweird.f32 %v138
    %vm156 = vweird.f32 %v149
    %vm157 = vmor %vm155, %vm156
    %v158 = vsel %vm157, %v149, %v154
    %v159 = vmul.f32 %v125, %v148
    %v160 = vmul.f32 %v126, %v158
    %v161 = vld [vmem:[%s4] sm:$0x1]
    %v163 = vperm.slane %v161, 0
    %v165 = vmul.f32 %v159, %v163
    %v166 = vmul.f32 %v160, %v163
    %v167 = vld [vmem:[%s5] sm:$0x1]
    %v169 = vperm.slane %v167, 0
    %v171 = vadd.f32 %v165, %v169
    %v172 = vadd.f32 %v166, %v169
    %173 = vst.msk [vmem:[#allocation8] sm:$0xff] %vm95, %v171
    %174 = vst.msk [vmem:[#allocation8 + $0x8] sm:$0xff] %vm95, %v172
    // Predicated region
    $region38: #{tpu_custom_call.1} parent=1 // pred_check
      _
    $region39: #{tpu_custom_call.1} parent=1 // pred_check_branch
      %176 = sbr.rel (0) target = $region41
    $region40: #{tpu_custom_call.1} parent=1 // pred_region
      %178 = vsyncadd [#allocation4], 0
      %s179 = sshll.u32 [#allocation8], 4
      %s180 = int_to_ptr.vmem [resolvable:$true] %s179
      %s181 = sshll.u32 %s6, 4
      %s182 = int_to_ptr.hbm [resolvable:$true] %s181
      %187 = dma.vmem_to_hbm [thread:$0]  %s180, 256, %s182, [#allocation4], 128, 128, 8
    $region41: #{tpu_custom_call.1} parent=1 // pred_fallthru
      _
    // Predicated region
    $region42: #{tpu_custom_call.1} parent=1 // pred_check
      _
    $region43: #{tpu_custom_call.1} parent=1 // pred_check_branch
      %189 = sbr.rel (0) target = $region45
    $region44: #{tpu_custom_call.1} parent=1 // pred_region
      %191 = dma.done [#allocation4], 256
    $region45: #{tpu_custom_call.1} parent=1 // pred_fallthru
      _
    %192 = vsyncpa [#allocation3], 1
    %193 = vsyncpa [#allocation6], 1
    %194 = vsyncpa [#allocation4], 1

</llo_original>
